<compile_context>
chip_gen: v5e
topology: v5e:2x2
jax: 0.10.0
libtpu: 0.0.40
codegen_flags: <defaults>
</compile_context>

<pallas_src>
import functools

import jax
import jax.numpy as jnp
import numpy as np
from jax.experimental import pallas as pl
from jax.experimental.pallas import tpu as pltpu

LANE = 128
CHUNK_ROWS = 128        # rows per inner accumulation chunk (keeps temporaries small)
MAX_BLOCK_ROWS = 4096   # (4096, 128) f32 = 2 MiB per input per grid step
SMALL_ROWS = 512        # at or below this, a single block / single pass


def _round_up(x, m):
    return ((x + m - 1) // m) * m


def _wbce_partials_kernel(logit_ref, truth_ref, out_ref, *, block_rows, rows,
                          mask_last_block):
    """Per-block lane-wise partial sums: rows of out = [pos*bce, neg*bce, pos, neg]."""
    i = pl.program_id(0)

    def chunk_sums(r0, nrows, masked):
        p = logit_ref[pl.ds(r0, nrows), :].astype(jnp.float32)
        t = truth_ref[pl.ds(r0, nrows), :].astype(jnp.float32)
        if masked:
            # Only whole OOB rows of the (partial) last block can hold garbage:
            # row-granular mask, sanitized BEFORE log() so NaNs cannot leak in.
            row = jax.lax.broadcasted_iota(jnp.int32, (nrows, LANE), 0)
            valid = (i * block_rows + r0 + row) < rows
            p = jnp.where(valid, p, jnp.float32(0.5))
            t = jnp.where(valid, t, jnp.float32(0.5))
        # binary_cross_entropy with PyTorch's log clamp at -100.
        log_p = jnp.maximum(jnp.log(p), -100.0)
        log_1mp = jnp.maximum(jnp.log(1.0 - p), -100.0)
        bce = -(t * log_p + (1.0 - t) * log_1mp)
        pos = (t > 0.5).astype(jnp.float32)
        neg = (t < 0.5).astype(jnp.float32)
        # Sublane-only reductions; the lane reduction happens once in the
        # wrapper on the tiny partials tensor.
        return (jnp.sum(pos * bce, axis=0, keepdims=True),
                jnp.sum(neg * bce, axis=0, keepdims=True),
                jnp.sum(pos, axis=0, keepdims=True),
                jnp.sum(neg, axis=0, keepdims=True))

    def block_sums(masked):
        if block_rows > CHUNK_ROWS and block_rows % CHUNK_ROWS == 0:
            # Chunked accumulation: bounds live ranges so block-sized f32
            # temporaries never spill to VMEM.
            def body(c, acc):
                r0 = pl.multiple_of(c * CHUNK_ROWS, CHUNK_ROWS)
                s = chunk_sums(r0, CHUNK_ROWS, masked)
                return tuple(a + b for a, b in zip(acc, s))

            init = tuple(jnp.zeros((1, LANE), jnp.float32) for _ in range(4))
            acc = jax.lax.fori_loop(0, block_rows // CHUNK_ROWS, body, init)
        else:
            acc = chunk_sums(0, block_rows, masked)
        out_ref[0, 0:1, :] = acc[0]
        out_ref[0, 1:2, :] = acc[1]
        out_ref[0, 2:3, :] = acc[2]
        out_ref[0, 3:4, :] = acc[3]

    if not mask_last_block:
        block_sums(False)
    else:
        nb = pl.num_programs(0)

        @pl.when(i != nb - 1)
        def _():
            block_sums(False)   # fast path: full blocks pay zero mask work

        @pl.when(i == nb - 1)
        def _():
            block_sums(True)    # only the last (partial) block pays for the mask


def weighted_bce(logit_pixel, truth_pixel, weights=(0.4, 0.6)):
    """Pallas TPU implementation of WeightedBCE.forward. Returns a scalar f32."""
    logit = jnp.reshape(logit_pixel, (-1,))
    truth = jnp.reshape(truth_pixel, (-1,))
    assert logit.shape == truth.shape
    n = int(logit.shape[0])

    # 128-aligned prefix goes through the kernel; the <128-element tail is
    # handled by the tiny JAX epilogue (no O(n) pad/concatenate copy).
    rows = n // LANE
    n_main = rows * LANE

    if rows > 0:
        if rows <= SMALL_ROWS:
            block_rows = rows                     # single full-array block
        else:
            # >= 2 blocks so both v7x TensorCores get work; block_rows is a
            # multiple of CHUNK_ROWS so the inner accumulation loop divides evenly.
            block_rows = min(MAX_BLOCK_ROWS,
                             _round_up(pl.cdiv(rows, 2), CHUNK_ROWS))
        num_blocks = pl.cdiv(rows, block_rows)
        mask_last_block = (rows % block_rows) != 0

        logit2d = logit[:n_main].reshape(rows, LANE)
        truth2d = truth[:n_main].reshape(rows, LANE)

        kernel = functools.partial(
            _wbce_partials_kernel,
            block_rows=block_rows, rows=rows, mask_last_block=mask_last_block)

        partials = pl.pallas_call(
            kernel,
            out_shape=jax.ShapeDtypeStruct((num_blocks, 4, LANE), jnp.float32),
            grid=(num_blocks,),
            in_specs=[
                pl.BlockSpec((block_rows, LANE), lambda i: (i, 0)),
                pl.BlockSpec((block_rows, LANE), lambda i: (i, 0)),
            ],
            out_specs=pl.BlockSpec((1, 4, LANE), lambda i: (i, 0, 0)),
            compiler_params=pltpu.CompilerParams(
                dimension_semantics=("parallel",),   # independent blocks -> both TCs on v7x
                vmem_limit_bytes=32 * 1024 * 1024,
            ),
        )(logit2d, truth2d)

        # Tiny epilogue: reduce (num_blocks, 4, 128) partials.
        sums = jnp.sum(partials, axis=(0, 2))  # [sum(pos*bce), sum(neg*bce), sum(pos), sum(neg)]
    else:
        sums = jnp.zeros((4,), jnp.float32)

    if n_main < n:
        # Tail of < 128 elements: O(128) work, done in plain JAX.
        p = logit[n_main:].astype(jnp.float32)
        t = truth[n_main:].astype(jnp.float32)
        log_p = jnp.maximum(jnp.log(p), -100.0)
        log_1mp = jnp.maximum(jnp.log(1.0 - p), -100.0)
        bce = -(t * log_p + (1.0 - t) * log_1mp)
        pos = (t > 0.5).astype(jnp.float32)
        neg = (t < 0.5).astype(jnp.float32)
        sums = sums + jnp.stack([jnp.sum(pos * bce), jnp.sum(neg * bce),
                                 jnp.sum(pos), jnp.sum(neg)])

    w_pos, w_neg = float(weights[0]), float(weights[1])
    return (w_pos * sums[0] / (sums[2] + 1e-12)
            + w_neg * sums[1] / (sums[3] + 1e-12))


def weighted_bce_ref(logit_pixel, truth_pixel, weights=(0.4, 0.6)):
    """Plain-JAX reference mirroring the PyTorch module."""
    logit = jnp.reshape(logit_pixel, (-1,)).astype(jnp.float32)
    truth = jnp.reshape(truth_pixel, (-1,)).astype(jnp.float32)
    log_p = jnp.maximum(jnp.log(logit), -100.0)
    log_1mp = jnp.maximum(jnp.log(1.0 - logit), -100.0)
    loss = -(truth * log_p + (1.0 - truth) * log_1mp)
    pos = (truth > 0.5).astype(jnp.float32)
    neg = (truth < 0.5).astype(jnp.float32)
    pos_w = jnp.sum(pos) + 1e-12
    neg_w = jnp.sum(neg) + 1e-12
    return jnp.sum(weights[0] * pos * loss / pos_w + weights[1] * neg * loss / neg_w)


if __name__ == "__main__":
    key = jax.random.PRNGKey(0)
    k1, k2, k3, k4, k5, k6 = jax.random.split(key, 6)

    # 1) Small NCHW shape, numel multiple of 128 (single-block fast path).
    shape = (2, 4, 16, 16)
    logit_pixel = jax.random.uniform(k1, shape, jnp.float32, minval=0.01, maxval=0.99)
    truth_pixel = jax.random.bernoulli(k2, 0.3, shape).astype(jnp.float32)
    out = jax.block_until_ready(weighted_bce(logit_pixel, truth_pixel))
    ref = jax.block_until_ready(weighted_bce_ref(logit_pixel, truth_pixel))
    np.testing.assert_allclose(np.asarray(out), np.asarray(ref), rtol=1e-5, atol=1e-6)

    # 2) numel not a multiple of 128: exercises the JAX tail epilogue.
    shape2 = (2, 3, 11, 13)
    logit2 = jax.random.uniform(k3, shape2, jnp.float32, minval=0.01, maxval=0.99)
    truth2 = jax.random.bernoulli(k4, 0.5, shape2).astype(jnp.float32)
    out2 = jax.block_until_ready(weighted_bce(logit2, truth2))
    ref2 = jax.block_until_ready(weighted_bce_ref(logit2, truth2))
    np.testing.assert_allclose(np.asarray(out2), np.asarray(ref2), rtol=1e-5, atol=1e-6)

    # 3) Larger shape: multi-block grid, inner chunk loop, masked partial last block.
    shape3 = (2, 4, 96, 100)   # 76800 elements -> 600 rows, 2 blocks of 384
    logit3 = jax.random.uniform(k5, shape3, jnp.float32, minval=0.01, maxval=0.99)
    truth3 = jax.random.bernoulli(k6, 0.4, shape3).astype(jnp.float32)
    out3 = jax.block_until_ready(weighted_bce(logit3, truth3))
    ref3 = jax.block_until_ready(weighted_bce_ref(logit3, truth3))
    np.testing.assert_allclose(np.asarray(out3), np.asarray(ref3), rtol=1e-4, atol=1e-6)

    print("KERNEL_OK")
</pallas_src>

<mosaic_0001>
module attributes {stable_mosaic.version = 11 : i64} {
  func.func @_wbce_partials_kernel(%arg0: i32, %arg1: memref<16x128xf32, #tpu.memory_space<vmem>>, %arg2: memref<16x128xf32, #tpu.memory_space<vmem>>, %arg3: memref<1x4x128xf32, #tpu.memory_space<vmem>>) attributes {dimension_semantics = [#tpu.dimension_semantics<parallel>], iteration_bounds = array<i64: 1>, scalar_prefetch = 0 : i64, scratch_operands = 0 : i64, tpu.core_type = #tpu.core_type<tc>, window_params = [{transform_indices = @transform_0, window_bounds = array<i64: 16, 128>}, {transform_indices = @transform_1, window_bounds = array<i64: 16, 128>}, {transform_indices = @transform_2, window_bounds = array<i64: 1, 4, 128>}]} {
    %c0 = arith.constant 0 : index
    %c0_0 = arith.constant 0 : index
    %0 = vector.load %arg1[%c0, %c0_0] : memref<16x128xf32, #tpu.memory_space<vmem>>, vector<16x128xf32>
    %c0_1 = arith.constant 0 : index
    %c0_2 = arith.constant 0 : index
    %1 = vector.load %arg2[%c0_1, %c0_2] : memref<16x128xf32, #tpu.memory_space<vmem>>, vector<16x128xf32>
    %2 = math.log %0 : vector<16x128xf32>
    %cst = arith.constant -1.000000e+02 : f32
    %3 = vector.broadcast %cst : f32 to vector<16x128xf32>
    %4 = arith.maximumf %2, %3 : vector<16x128xf32>
    %cst_3 = arith.constant 1.000000e+00 : f32
    %5 = vector.broadcast %cst_3 : f32 to vector<16x128xf32>
    %6 = arith.subf %5, %0 : vector<16x128xf32>
    %7 = math.log %6 : vector<16x128xf32>
    %cst_4 = arith.constant -1.000000e+02 : f32
    %8 = vector.broadcast %cst_4 : f32 to vector<16x128xf32>
    %9 = arith.maximumf %7, %8 : vector<16x128xf32>
    %10 = arith.mulf %1, %4 : vector<16x128xf32>
    %cst_5 = arith.constant 1.000000e+00 : f32
    %11 = vector.broadcast %cst_5 : f32 to vector<16x128xf32>
    %12 = arith.subf %11, %1 : vector<16x128xf32>
    %13 = arith.mulf %12, %9 : vector<16x128xf32>
    %14 = arith.addf %10, %13 : vector<16x128xf32>
    %cst_6 = arith.constant 0.000000e+00 : f32
    %15 = vector.broadcast %cst_6 : f32 to vector<16x128xf32>
    %16 = arith.subf %15, %14 : vector<16x128xf32>
    %cst_7 = arith.constant 5.000000e-01 : f32
    %17 = vector.broadcast %cst_7 : f32 to vector<16x128xf32>
    %18 = arith.cmpf ogt, %1, %17 : vector<16x128xf32>
    %19 = arith.extui %18 : vector<16x128xi1> to vector<16x128xi32>
    %20 = arith.sitofp %19 : vector<16x128xi32> to vector<16x128xf32>
    %cst_8 = arith.constant 5.000000e-01 : f32
    %21 = vector.broadcast %cst_8 : f32 to vector<16x128xf32>
    %22 = arith.cmpf olt, %1, %21 : vector<16x128xf32>
    %23 = arith.extui %22 : vector<16x128xi1> to vector<16x128xi32>
    %24 = arith.sitofp %23 : vector<16x128xi32> to vector<16x128xf32>
    %25 = arith.mulf %20, %16 : vector<16x128xf32>
    %cst_9 = arith.constant dense<0.000000e+00> : vector<128xf32>
    %26 = vector.multi_reduction <add>, %25, %cst_9 [0] : vector<16x128xf32> to vector<128xf32>
    %27 = vector.shape_cast %26 : vector<128xf32> to vector<1x128xf32>
    %28 = arith.mulf %24, %16 : vector<16x128xf32>
    %cst_10 = arith.constant dense<0.000000e+00> : vector<128xf32>
    %29 = vector.multi_reduction <add>, %28, %cst_10 [0] : vector<16x128xf32> to vector<128xf32>
    %30 = vector.shape_cast %29 : vector<128xf32> to vector<1x128xf32>
    %cst_11 = arith.constant dense<0.000000e+00> : vector<128xf32>
    %31 = vector.multi_reduction <add>, %20, %cst_11 [0] : vector<16x128xf32> to vector<128xf32>
    %32 = vector.shape_cast %31 : vector<128xf32> to vector<1x128xf32>
    %cst_12 = arith.constant dense<0.000000e+00> : vector<128xf32>
    %33 = vector.multi_reduction <add>, %24, %cst_12 [0] : vector<16x128xf32> to vector<128xf32>
    %34 = vector.shape_cast %33 : vector<128xf32> to vector<1x128xf32>
    %c0_13 = arith.constant 0 : index
    %c0_14 = arith.constant 0 : index
    %c0_15 = arith.constant 0 : index
    %35 = vector.load %arg3[%c0_13, %c0_14, %c0_15] : memref<1x4x128xf32, #tpu.memory_space<vmem>>, vector<1x1x128xf32>
    %36 = vector.shape_cast %35 : vector<1x1x128xf32> to vector<1x128xf32>
    %37 = vector.shape_cast %27 : vector<1x128xf32> to vector<1x1x128xf32>
    tpu.vector_store %arg3[%c0_13, %c0_14, %c0_15], %37 {strides = array<i32>} : memref<1x4x128xf32, #tpu.memory_space<vmem>>, vector<1x1x128xf32>,
    %c0_16 = arith.constant 0 : index
    %c1 = arith.constant 1 : index
    %c0_17 = arith.constant 0 : index
    %38 = vector.load %arg3[%c0_16, %c1, %c0_17] : memref<1x4x128xf32, #tpu.memory_space<vmem>>, vector<1x1x128xf32>
    %39 = vector.shape_cast %38 : vector<1x1x128xf32> to vector<1x128xf32>
    %40 = vector.shape_cast %30 : vector<1x128xf32> to vector<1x1x128xf32>
    tpu.vector_store %arg3[%c0_16, %c1, %c0_17], %40 {strides = array<i32>} : memref<1x4x128xf32, #tpu.memory_space<vmem>>, vector<1x1x128xf32>,
    %c0_18 = arith.constant 0 : index
    %c2 = arith.constant 2 : index
    %c0_19 = arith.constant 0 : index
    %41 = vector.load %arg3[%c0_18, %c2, %c0_19] : memref<1x4x128xf32, #tpu.memory_space<vmem>>, vector<1x1x128xf32>
    %42 = vector.shape_cast %41 : vector<1x1x128xf32> to vector<1x128xf32>
    %43 = vector.shape_cast %32 : vector<1x128xf32> to vector<1x1x128xf32>
    tpu.vector_store %arg3[%c0_18, %c2, %c0_19], %43 {strides = array<i32>} : memref<1x4x128xf32, #tpu.memory_space<vmem>>, vector<1x1x128xf32>,
    %c0_20 = arith.constant 0 : index
    %c3 = arith.constant 3 : index
    %c0_21 = arith.constant 0 : index
    %44 = vector.load %arg3[%c0_20, %c3, %c0_21] : memref<1x4x128xf32, #tpu.memory_space<vmem>>, vector<1x1x128xf32>
    %45 = vector.shape_cast %44 : vector<1x1x128xf32> to vector<1x128xf32>
    %46 = vector.shape_cast %34 : vector<1x128xf32> to vector<1x1x128xf32>
    tpu.vector_store %arg3[%c0_20, %c3, %c0_21], %46 {strides = array<i32>} : memref<1x4x128xf32, #tpu.memory_space<vmem>>, vector<1x1x128xf32>,
    return
  }
  func.func @transform_0(%arg0: i32) -> (i32, i32) {
    %c0_i32 = arith.constant 0 : i32
    %c0_i32_0 = arith.constant 0 : i32
    return %arg0, %c0_i32 : i32, i32
  }
  func.func @transform_1(%arg0: i32) -> (i32, i32) {
    %c0_i32 = arith.constant 0 : i32
    %c0_i32_0 = arith.constant 0 : i32
    return %arg0, %c0_i32 : i32, i32
  }
  func.func @transform_2(%arg0: i32) -> (i32, i32, i32) {
    %c0_i32 = arith.constant 0 : i32
    %c0_i32_0 = arith.constant 0 : i32
    %c0_i32_1 = arith.constant 0 : i32
    return %arg0, %c0_i32, %c0_i32_0 : i32, i32, i32
  }
}

</mosaic_0001>

<llo_original>
// kernel: tpu_custom_call.1
$region0: #{tpu_custom_call.1}
  #allocation0 [shape = 'u32[]', space=smem, size = 0x4, offset = 0x4, fixed_abs, tag = 'smem constant byte address 0x4 - core index']
  #allocation1 [shape = 'u32[72,128]{1,0:T(1,128)}', space=vmem, size = 0x9000, scoped, tag = 'internal scratch']
  %s0 = inlined_call_operand.hbm [shape: f32[16,128], index: 0, kind: input, shape index: {}]
  %s1 = inlined_call_operand.hbm [shape: f32[16,128], index: 1, kind: input, shape index: {}]
  %s2 = inlined_call_operand.hbm [shape: f32[1,4,128], index: 2, kind: output, shape index: {}]
  %s3 = sld [smem:[#allocation0]]
  $region26: #{tpu_custom_call.1} parent=0
    _
  %s5 = ssub.s32 1, %s3
  %s6 = scalar_select 0, %s5, %s3
  $region1: #{tpu_custom_call.1} parent=0
    #allocation2 [shape = 'u8[8192]{0}', space=vmem, size = 0x2000, scoped, tag = 'input window, operand 0, single buffered']
    #allocation3 [shape = 's32[1]{0}', space=sflag, size = 0x4, scoped, tag = 'scoped memory for tpu_custom_call.1']
    #allocation4 [shape = 's32[1]{0}', space=sflag, size = 0x4, scoped, tag = 'scoped memory for tpu_custom_call.1']
    #allocation5 [shape = 'u8[8192]{0}', space=vmem, size = 0x2000, scoped, tag = 'input window, operand 1, single buffered']
    #allocation6 [shape = 's32[1]{0}', space=sflag, size = 0x4, scoped, tag = 'scoped memory for tpu_custom_call.1']
    #allocation7 [shape = 'u8[2048]{0}', space=vmem, size = 0x800, scoped, tag = 'output window, operand 0, single buffered']
    %7 = vsyncpa [#allocation3], 0
    %8 = vsyncpa [#allocation6], 0
    %9 = vsyncpa [#allocation4], 0
    // Predicated region
    $region2: #{tpu_custom_call.1} parent=1 // pred_check
      _
    $region3: #{tpu_custom_call.1} parent=1 // pred_check_branch
      %11 = sbr.rel (0) target = $region5
    $region4: #{tpu_custom_call.1} parent=1 // pred_region
      %13 = vsyncadd [#allocation3], 0
      %s14 = sshll.u32 %s0, 4
      %s15 = int_to_ptr.hbm [resolvable:$true] %s14
      %s16 = sshll.u32 [#allocation2], 4
      %s17 = int_to_ptr.vmem [resolvable:$true] %s16
      %22 = dma.hbm_to_vmem [thread:$0]  %s15, 256, %s17, [#allocation3], 128, 128, 8
    $region5: #{tpu_custom_call.1} parent=1 // pred_fallthru
      _
    // Predicated region
    $region6: #{tpu_custom_call.1} parent=1 // pred_check
      _
    $region7: #{tpu_custom_call.1} parent=1 // pred_check_branch
      %24 = sbr.rel (0) target = $region9
    $region8: #{tpu_custom_call.1} parent=1 // pred_region
      %26 = vsyncadd [#allocation6], 0
      %s27 = sshll.u32 %s1, 4
      %s28 = int_to_ptr.hbm [resolvable:$true] %s27
      %s29 = sshll.u32 [#allocation5], 4
      %s30 = int_to_ptr.vmem [resolvable:$true] %s29
      %35 = dma.hbm_to_vmem [thread:$0]  %s28, 256, %s30, [#allocation6], 128, 128, 8
    $region9: #{tpu_custom_call.1} parent=1 // pred_fallthru
      _
    // Predicated region
    $region10: #{tpu_custom_call.1} parent=1 // pred_check
      _
    $region11: #{tpu_custom_call.1} parent=1 // pred_check_branch
      %37 = sbr.rel (0) target = $region13
    $region12: #{tpu_custom_call.1} parent=1 // pred_region
      %39 = dma.done [#allocation3], 256
    $region13: #{tpu_custom_call.1} parent=1 // pred_fallthru
      _
    // Predicated region
    $region14: #{tpu_custom_call.1} parent=1 // pred_check
      _
    $region15: #{tpu_custom_call.1} parent=1 // pred_check_branch
      %41 = sbr.rel (0) target = $region17
    $region16: #{tpu_custom_call.1} parent=1 // pred_region
      %43 = dma.done [#allocation6], 256
    $region17: #{tpu_custom_call.1} parent=1 // pred_fallthru
      _
    %v44 = vld [vmem:[#allocation2] sm:$0xff]
    %v45 = vld [vmem:[#allocation2 + $0x8] sm:$0xff]
    %v46 = vld [vmem:[#allocation5] sm:$0xff]
    %v47 = vld [vmem:[#allocation5 + $0x8] sm:$0xff]
    %v48 = vlog2.pop %v44
    %v49 = vmul.f32 %v48, 0.6931472
    %v50 = vlog2.pop %v45
    %v51 = vmul.f32 %v50, 0.6931472
    %v52 = vmax.f32 %v49, -100.0
    %v53 = vmax.f32 %v51, -100.0
    %v54 = vsub.f32 1.0, %v44
    %v55 = vsub.f32 1.0, %v45
    %v56 = vlog2.pop %v54
    %v57 = vmul.f32 %v56, 0.6931472
    %v58 = vlog2.pop %v55
    %v59 = vmul.f32 %v58, 0.6931472
    %v60 = vmax.f32 %v57, -100.0
    %v61 = vmax.f32 %v59, -100.0
    %v62 = vmul.f32 %v46, %v52
    %v63 = vmul.f32 %v47, %v53
    %v64 = vsub.f32 1.0, %v46
    %v65 = vsub.f32 1.0, %v47
    %v66 = vmul.f32 %v64, %v60
    %v67 = vmul.f32 %v65, %v61
    %v68 = vadd.f32 %v62, %v66
    %v69 = vadd.f32 %v63, %v67
    %v70 = vsub.f32 0.0, %v68
    %v71 = vsub.f32 0.0, %v69
    %vm72 = vcmp.gt.f32.partialorder %v46, 0.5
    %vm73 = vcmp.gt.f32.partialorder %v47, 0.5
    %v74 = vsel %vm72, 1, 0
    %v75 = vsel %vm73, 1, 0
    %v76 = vcvt.s32.f32 %v74
    %v77 = vcvt.s32.f32 %v75
    %vm78 = vcmp.lt.f32.partialorder %v46, 0.5
    %vm79 = vcmp.lt.f32.partialorder %v47, 0.5
    %v80 = vsel %vm78, 1, 0
    %v81 = vsel %vm79, 1, 0
    %v82 = vcvt.s32.f32 %v80
    %v83 = vcvt.s32.f32 %v81
    %v84 = vmul.f32 %v76, %v70
    %v85 = vmul.f32 %v77, %v71
    %v86 = vadd.f32 %v84, %v85
    %v87 = vrot.slane %v86, 4
    %v88 = vadd.f32 %v86, %v87
    %v89 = vrot.slane %v88, 2
    %v90 = vadd.f32 %v88, %v89
    %v91 = vrot.slane %v90, 1
    %v92 = vadd.f32 %v90, %v91
    %v93 = vmul.f32 %v82, %v70
    %v94 = vmul.f32 %v83, %v71
    %v95 = vadd.f32 %v93, %v94
    %v96 = vrot.slane %v95, 4
    %v97 = vadd.f32 %v95, %v96
    %v98 = vrot.slane %v97, 2
    %v99 = vadd.f32 %v97, %v98
    %v100 = vrot.slane %v99, 1
    %v101 = vadd.f32 %v99, %v100
    %v102 = vadd.f32 %v76, %v77
    %v103 = vrot.slane %v102, 4
    %v104 = vadd.f32 %v102, %v103
    %v105 = vrot.slane %v104, 2
    %v106 = vadd.f32 %v104, %v105
    %v107 = vrot.slane %v106, 1
    %v108 = vadd.f32 %v106, %v107
    %v109 = vadd.f32 %v82, %v83
    %v110 = vrot.slane %v109, 4
    %v111 = vadd.f32 %v109, %v110
    %v112 = vrot.slane %v111, 2
    %v113 = vadd.f32 %v111, %v112
    %v114 = vrot.slane %v113, 1
    %v115 = vadd.f32 %v113, %v114
    %116 = vst [vmem:[#allocation7] sm:$0x1] %v92
    %117 = vst [vmem:[#allocation7 + $0x1] sm:$0x1] %v101
    %118 = vst [vmem:[#allocation7 + $0x2] sm:$0x1] %v108
    %119 = vst [vmem:[#allocation7 + $0x3] sm:$0x1] %v115
    // Predicated region
    $region18: #{tpu_custom_call.1} parent=1 // pred_check
      _
    $region19: #{tpu_custom_call.1} parent=1 // pred_check_branch
      %121 = sbr.rel (0) target = $region21
    $region20: #{tpu_custom_call.1} parent=1 // pred_region
      %123 = vsyncadd [#allocation4], 0
      %s125 = sshll.u32 [#allocation7], 4
      %s126 = int_to_ptr.vmem [resolvable:$true] %s125
      %s127 = sshll.u32 %s2, 4
      %s128 = int_to_ptr.hbm [resolvable:$true] %s127
      %130 = dma.vmem_to_hbm [thread:$0]  %s126, 64, %s128, [#allocation4]
    $region21: #{tpu_custom_call.1} parent=1 // pred_fallthru
      _
    // Predicated region
    $region22: #{tpu_custom_call.1} parent=1 // pred_check
      _
    $region23: #{tpu_custom_call.1} parent=1 // pred_check_branch
      %132 = sbr.rel (0) target = $region25
    $region24: #{tpu_custom_call.1} parent=1 // pred_region
      %134 = dma.done [#allocation4], 64
    $region25: #{tpu_custom_call.1} parent=1 // pred_fallthru
      _
    %135 = vsyncpa [#allocation3], 1
    %136 = vsyncpa [#allocation6], 1
    %137 = vsyncpa [#allocation4], 1

</llo_original>
